<compile_context>
chip_gen: v7x
topology: tpu7x:2x2x1
jax: 0.10.0
libtpu: 0.0.40
codegen_flags: <defaults>
</compile_context>

<pallas_src>
import jax
import jax.numpy as jnp
from jax.experimental import pallas as pl
from jax.experimental.pallas import tpu as pltpu

D_IN, HID, D_OUT = 2, 10, 2   # logical (PyTorch) sizes
LANE = 128                    # lanes per vreg row
MIN_TB = 8 * LANE             # smallest legal batch tile (8 sublanes x 128 lanes)


def _round_up(n, m):
    return ((n + m - 1) // m) * m


def mlp_kernel(x_ref, w1_ref, b1_ref, w2_ref, b2_ref, o_ref):
    # x_ref / o_ref blocks: [D, SB, 128]  (feature, sublane-rows, lanes) -- fully dense.
    x0 = x_ref[0]                                    # [SB, 128] feature 0 of tb samples
    x1 = x_ref[1]                                    # [SB, 128] feature 1
    y0 = jnp.zeros_like(x0) + b2_ref[0]
    y1 = jnp.zeros_like(x0) + b2_ref[1]
    # fc1 + ReLU + fc2 as unrolled VPU broadcast-FMAs (weights are SMEM scalars).
    for j in range(HID):                             # trace-time unrolled, 10 iters
        h = jnp.maximum(x0 * w1_ref[j, 0] + x1 * w1_ref[j, 1] + b1_ref[j], 0.0)
        y0 = y0 + h * w2_ref[0, j]
        y1 = y1 + h * w2_ref[1, j]
    # Dropout(0.5) is identity in eval mode.
    o_ref[0] = y0
    o_ref[1] = y1


def _choose_tb(B, tb_max):
    """Batch tile (samples) -- multiple of 1024, big, but >=2 grid steps when possible."""
    tb = min(tb_max, _round_up(B, MIN_TB))
    if _round_up(B, MIN_TB) >= 2 * MIN_TB:
        # enough rows for >= 2 blocks -> let the "parallel" axis use both TCs (v7x)
        tb = min(tb, _round_up(-(-B // 2), MIN_TB))
    return tb


def mlp_forward(x, w1, b1, w2, b2, *, tb_max=32768):
    """x: [B, 2] f32; w1: [10, 2]; b1: [10]; w2: [2, 10]; b2: [2]  (PyTorch layout)."""
    B = x.shape[0]
    tb = _choose_tb(B, tb_max)
    B_pad = _round_up(B, tb)
    sb = tb // LANE                       # sublane-rows per block

    # Feature-major, lane-dense presentation of the input: [D_IN, B_pad/128, 128].
    xt = jnp.transpose(x.astype(jnp.float32))            # [2, B]
    if B_pad != B:
        xt = jnp.pad(xt, ((0, 0), (0, B_pad - B)))        # only when ragged
    xr = xt.reshape(D_IN, B_pad // LANE, LANE)

    smem_spec = pl.BlockSpec(memory_space=pltpu.MemorySpace.SMEM)

    out = pl.pallas_call(
        mlp_kernel,
        out_shape=jax.ShapeDtypeStruct((D_OUT, B_pad // LANE, LANE), jnp.float32),
        grid=(B_pad // tb,),
        in_specs=[
            pl.BlockSpec((D_IN, sb, LANE), lambda i: (0, i, 0)),   # x: tiled over batch
            smem_spec,                                             # w1 scalars
            smem_spec,                                             # b1 scalars
            smem_spec,                                             # w2 scalars
            smem_spec,                                             # b2 scalars
        ],
        out_specs=pl.BlockSpec((D_OUT, sb, LANE), lambda i: (0, i, 0)),
        compiler_params=pltpu.CompilerParams(
            dimension_semantics=("parallel",),    # independent batch blocks -> megacore
        ),
    )(
        xr,
        w1.astype(jnp.float32),
        b1.astype(jnp.float32),
        w2.astype(jnp.float32),
        b2.astype(jnp.float32),
    )

    y = out.reshape(D_OUT, B_pad)
    if B_pad != B:
        y = y[:, :B]
    return jnp.transpose(y)                                # [B, 2]


def _ref(x, w1, b1, w2, b2):
    return jnp.maximum(x @ w1.T + b1, 0.0) @ w2.T + b2


if __name__ == "__main__":
    key = jax.random.PRNGKey(0)
    kx, k1, k2, k3, k4, kx2 = jax.random.split(key, 6)

    # Deterministic parameter init (uniform, torch.nn.Linear-style bounds).
    bound1 = 1.0 / (D_IN ** 0.5)
    bound2 = 1.0 / (HID ** 0.5)
    w1 = jax.random.uniform(k1, (HID, D_IN), jnp.float32, -bound1, bound1)
    b1 = jax.random.uniform(k2, (HID,), jnp.float32, -bound1, bound1)
    w2 = jax.random.uniform(k3, (D_OUT, HID), jnp.float32, -bound2, bound2)
    b2 = jax.random.uniform(k4, (D_OUT,), jnp.float32, -bound2, bound2)

    # Small batch (single grid step, padded tail masked off by the wrapper slice).
    B = 8
    x = jax.random.normal(kx, (B, D_IN), jnp.float32)
    y = mlp_forward(x, w1, b1, w2, b2)
    jax.block_until_ready(y)
    assert y.shape == (B, D_OUT)
    assert jnp.allclose(y, _ref(x, w1, b1, w2, b2), atol=1e-5, rtol=1e-5)

    # Larger, non-divisible batch -> tb=2048, B_pad=4096, grid=(2,) (exercises
    # the parallel batch grid + ragged-tail padding path).
    B2 = 3000
    x2 = jax.random.normal(kx2, (B2, D_IN), jnp.float32)
    y2 = mlp_forward(x2, w1, b1, w2, b2)
    jax.block_until_ready(y2)
    assert y2.shape == (B2, D_OUT)
    assert jnp.allclose(y2, _ref(x2, w1, b1, w2, b2), atol=1e-5, rtol=1e-5)

    print("KERNEL_OK")
</pallas_src>

<mosaic_0001>
module attributes {stable_mosaic.version = 11 : i64} {
  func.func @mlp_kernel(%arg0: i32, %arg1: memref<2x8x128xf32, #tpu.memory_space<vmem>>, %arg2: memref<10x2xf32, #tpu.memory_space<smem>>, %arg3: memref<10xf32, #tpu.memory_space<smem>>, %arg4: memref<2x10xf32, #tpu.memory_space<smem>>, %arg5: memref<2xf32, #tpu.memory_space<smem>>, %arg6: memref<2x8x128xf32, #tpu.memory_space<vmem>>) attributes {dimension_semantics = [#tpu.dimension_semantics<parallel>], iteration_bounds = array<i64: 1>, scalar_prefetch = 0 : i64, scratch_operands = 0 : i64, tpu.core_type = #tpu.core_type<tc>, window_params = [{transform_indices = @transform_0, window_bounds = array<i64: 2, 8, 128>}, {transform_indices = @transform_1, window_bounds = array<i64: 10, 2>}, {transform_indices = @transform_2, window_bounds = array<i64: 10>}, {transform_indices = @transform_3, window_bounds = array<i64: 2, 10>}, {transform_indices = @transform_4, window_bounds = array<i64: 2>}, {transform_indices = @transform_5, window_bounds = array<i64: 2, 8, 128>}]} {
    %c0 = arith.constant 0 : index
    %c0_0 = arith.constant 0 : index
    %c0_1 = arith.constant 0 : index
    %0 = vector.load %arg1[%c0, %c0_0, %c0_1] : memref<2x8x128xf32, #tpu.memory_space<vmem>>, vector<1x8x128xf32>
    %1 = vector.shape_cast %0 : vector<1x8x128xf32> to vector<8x128xf32>
    %c1 = arith.constant 1 : index
    %c0_2 = arith.constant 0 : index
    %c0_3 = arith.constant 0 : index
    %2 = vector.load %arg1[%c1, %c0_2, %c0_3] : memref<2x8x128xf32, #tpu.memory_space<vmem>>, vector<1x8x128xf32>
    %3 = vector.shape_cast %2 : vector<1x8x128xf32> to vector<8x128xf32>
    %cst = arith.constant 0.000000e+00 : f32
    %4 = vector.broadcast %cst : f32 to vector<8x128xf32>
    %c0_4 = arith.constant 0 : index
    %5 = memref.load %arg5[%c0_4] : memref<2xf32, #tpu.memory_space<smem>>
    %6 = vector.broadcast %5 : f32 to vector<8x128xf32>
    %7 = arith.addf %4, %6 : vector<8x128xf32>
    %cst_5 = arith.constant 0.000000e+00 : f32
    %8 = vector.broadcast %cst_5 : f32 to vector<8x128xf32>
    %c1_6 = arith.constant 1 : index
    %9 = memref.load %arg5[%c1_6] : memref<2xf32, #tpu.memory_space<smem>>
    %10 = vector.broadcast %9 : f32 to vector<8x128xf32>
    %11 = arith.addf %8, %10 : vector<8x128xf32>
    %c0_7 = arith.constant 0 : index
    %c0_8 = arith.constant 0 : index
    %12 = memref.load %arg2[%c0_7, %c0_8] : memref<10x2xf32, #tpu.memory_space<smem>>
    %13 = vector.broadcast %12 : f32 to vector<8x128xf32>
    %14 = arith.mulf %1, %13 : vector<8x128xf32>
    %c0_9 = arith.constant 0 : index
    %c1_10 = arith.constant 1 : index
    %15 = memref.load %arg2[%c0_9, %c1_10] : memref<10x2xf32, #tpu.memory_space<smem>>
    %16 = vector.broadcast %15 : f32 to vector<8x128xf32>
    %17 = arith.mulf %3, %16 : vector<8x128xf32>
    %18 = arith.addf %14, %17 : vector<8x128xf32>
    %c0_11 = arith.constant 0 : index
    %19 = memref.load %arg3[%c0_11] : memref<10xf32, #tpu.memory_space<smem>>
    %20 = vector.broadcast %19 : f32 to vector<8x128xf32>
    %21 = arith.addf %18, %20 : vector<8x128xf32>
    %cst_12 = arith.constant 0.000000e+00 : f32
    %22 = vector.broadcast %cst_12 : f32 to vector<8x128xf32>
    %23 = arith.maximumf %21, %22 : vector<8x128xf32>
    %c0_13 = arith.constant 0 : index
    %c0_14 = arith.constant 0 : index
    %24 = memref.load %arg4[%c0_13, %c0_14] : memref<2x10xf32, #tpu.memory_space<smem>>
    %25 = vector.broadcast %24 : f32 to vector<8x128xf32>
    %26 = arith.mulf %23, %25 : vector<8x128xf32>
    %27 = arith.addf %7, %26 : vector<8x128xf32>
    %c1_15 = arith.constant 1 : index
    %c0_16 = arith.constant 0 : index
    %28 = memref.load %arg4[%c1_15, %c0_16] : memref<2x10xf32, #tpu.memory_space<smem>>
    %29 = vector.broadcast %28 : f32 to vector<8x128xf32>
    %30 = arith.mulf %23, %29 : vector<8x128xf32>
    %31 = arith.addf %11, %30 : vector<8x128xf32>
    %c1_17 = arith.constant 1 : index
    %c0_18 = arith.constant 0 : index
    %32 = memref.load %arg2[%c1_17, %c0_18] : memref<10x2xf32, #tpu.memory_space<smem>>
    %33 = vector.broadcast %32 : f32 to vector<8x128xf32>
    %34 = arith.mulf %1, %33 : vector<8x128xf32>
    %c1_19 = arith.constant 1 : index
    %c1_20 = arith.constant 1 : index
    %35 = memref.load %arg2[%c1_19, %c1_20] : memref<10x2xf32, #tpu.memory_space<smem>>
    %36 = vector.broadcast %35 : f32 to vector<8x128xf32>
    %37 = arith.mulf %3, %36 : vector<8x128xf32>
    %38 = arith.addf %34, %37 : vector<8x128xf32>
    %c1_21 = arith.constant 1 : index
    %39 = memref.load %arg3[%c1_21] : memref<10xf32, #tpu.memory_space<smem>>
    %40 = vector.broadcast %39 : f32 to vector<8x128xf32>
    %41 = arith.addf %38, %40 : vector<8x128xf32>
    %cst_22 = arith.constant 0.000000e+00 : f32
    %42 = vector.broadcast %cst_22 : f32 to vector<8x128xf32>
    %43 = arith.maximumf %41, %42 : vector<8x128xf32>
    %c0_23 = arith.constant 0 : index
    %c1_24 = arith.constant 1 : index
    %44 = memref.load %arg4[%c0_23, %c1_24] : memref<2x10xf32, #tpu.memory_space<smem>>
    %45 = vector.broadcast %44 : f32 to vector<8x128xf32>
    %46 = arith.mulf %43, %45 : vector<8x128xf32>
    %47 = arith.addf %27, %46 : vector<8x128xf32>
    %c1_25 = arith.constant 1 : index
    %c1_26 = arith.constant 1 : index
    %48 = memref.load %arg4[%c1_25, %c1_26] : memref<2x10xf32, #tpu.memory_space<smem>>
    %49 = vector.broadcast %48 : f32 to vector<8x128xf32>
    %50 = arith.mulf %43, %49 : vector<8x128xf32>
    %51 = arith.addf %31, %50 : vector<8x128xf32>
    %c2 = arith.constant 2 : index
    %c0_27 = arith.constant 0 : index
    %52 = memref.load %arg2[%c2, %c0_27] : memref<10x2xf32, #tpu.memory_space<smem>>
    %53 = vector.broadcast %52 : f32 to vector<8x128xf32>
    %54 = arith.mulf %1, %53 : vector<8x128xf32>
    %c2_28 = arith.constant 2 : index
    %c1_29 = arith.constant 1 : index
    %55 = memref.load %arg2[%c2_28, %c1_29] : memref<10x2xf32, #tpu.memory_space<smem>>
    %56 = vector.broadcast %55 : f32 to vector<8x128xf32>
    %57 = arith.mulf %3, %56 : vector<8x128xf32>
    %58 = arith.addf %54, %57 : vector<8x128xf32>
    %c2_30 = arith.constant 2 : index
    %59 = memref.load %arg3[%c2_30] : memref<10xf32, #tpu.memory_space<smem>>
    %60 = vector.broadcast %59 : f32 to vector<8x128xf32>
    %61 = arith.addf %58, %60 : vector<8x128xf32>
    %cst_31 = arith.constant 0.000000e+00 : f32
    %62 = vector.broadcast %cst_31 : f32 to vector<8x128xf32>
    %63 = arith.maximumf %61, %62 : vector<8x128xf32>
    %c0_32 = arith.constant 0 : index
    %c2_33 = arith.constant 2 : index
    %64 = memref.load %arg4[%c0_32, %c2_33] : memref<2x10xf32, #tpu.memory_space<smem>>
    %65 = vector.broadcast %64 : f32 to vector<8x128xf32>
    %66 = arith.mulf %63, %65 : vector<8x128xf32>
    %67 = arith.addf %47, %66 : vector<8x128xf32>
    %c1_34 = arith.constant 1 : index
    %c2_35 = arith.constant 2 : index
    %68 = memref.load %arg4[%c1_34, %c2_35] : memref<2x10xf32, #tpu.memory_space<smem>>
    %69 = vector.broadcast %68 : f32 to vector<8x128xf32>
    %70 = arith.mulf %63, %69 : vector<8x128xf32>
    %71 = arith.addf %51, %70 : vector<8x128xf32>
    %c3 = arith.constant 3 : index
    %c0_36 = arith.constant 0 : index
    %72 = memref.load %arg2[%c3, %c0_36] : memref<10x2xf32, #tpu.memory_space<smem>>
    %73 = vector.broadcast %72 : f32 to vector<8x128xf32>
    %74 = arith.mulf %1, %73 : vector<8x128xf32>
    %c3_37 = arith.constant 3 : index
    %c1_38 = arith.constant 1 : index
    %75 = memref.load %arg2[%c3_37, %c1_38] : memref<10x2xf32, #tpu.memory_space<smem>>
    %76 = vector.broadcast %75 : f32 to vector<8x128xf32>
    %77 = arith.mulf %3, %76 : vector<8x128xf32>
    %78 = arith.addf %74, %77 : vector<8x128xf32>
    %c3_39 = arith.constant 3 : index
    %79 = memref.load %arg3[%c3_39] : memref<10xf32, #tpu.memory_space<smem>>
    %80 = vector.broadcast %79 : f32 to vector<8x128xf32>
    %81 = arith.addf %78, %80 : vector<8x128xf32>
    %cst_40 = arith.constant 0.000000e+00 : f32
    %82 = vector.broadcast %cst_40 : f32 to vector<8x128xf32>
    %83 = arith.maximumf %81, %82 : vector<8x128xf32>
    %c0_41 = arith.constant 0 : index
    %c3_42 = arith.constant 3 : index
    %84 = memref.load %arg4[%c0_41, %c3_42] : memref<2x10xf32, #tpu.memory_space<smem>>
    %85 = vector.broadcast %84 : f32 to vector<8x128xf32>
    %86 = arith.mulf %83, %85 : vector<8x128xf32>
    %87 = arith.addf %67, %86 : vector<8x128xf32>
    %c1_43 = arith.constant 1 : index
    %c3_44 = arith.constant 3 : index
    %88 = memref.load %arg4[%c1_43, %c3_44] : memref<2x10xf32, #tpu.memory_space<smem>>
    %89 = vector.broadcast %88 : f32 to vector<8x128xf32>
    %90 = arith.mulf %83, %89 : vector<8x128xf32>
    %91 = arith.addf %71, %90 : vector<8x128xf32>
    %c4 = arith.constant 4 : index
    %c0_45 = arith.constant 0 : index
    %92 = memref.load %arg2[%c4, %c0_45] : memref<10x2xf32, #tpu.memory_space<smem>>
    %93 = vector.broadcast %92 : f32 to vector<8x128xf32>
    %94 = arith.mulf %1, %93 : vector<8x128xf32>
    %c4_46 = arith.constant 4 : index
    %c1_47 = arith.constant 1 : index
    %95 = memref.load %arg2[%c4_46, %c1_47] : memref<10x2xf32, #tpu.memory_space<smem>>
    %96 = vector.broadcast %95 : f32 to vector<8x128xf32>
    %97 = arith.mulf %3, %96 : vector<8x128xf32>
    %98 = arith.addf %94, %97 : vector<8x128xf32>
    %c4_48 = arith.constant 4 : index
    %99 = memref.load %arg3[%c4_48] : memref<10xf32, #tpu.memory_space<smem>>
    %100 = vector.broadcast %99 : f32 to vector<8x128xf32>
    %101 = arith.addf %98, %100 : vector<8x128xf32>
    %cst_49 = arith.constant 0.000000e+00 : f32
    %102 = vector.broadcast %cst_49 : f32 to vector<8x128xf32>
    %103 = arith.maximumf %101, %102 : vector<8x128xf32>
    %c0_50 = arith.constant 0 : index
    %c4_51 = arith.constant 4 : index
    %104 = memref.load %arg4[%c0_50, %c4_51] : memref<2x10xf32, #tpu.memory_space<smem>>
    %105 = vector.broadcast %104 : f32 to vector<8x128xf32>
    %106 = arith.mulf %103, %105 : vector<8x128xf32>
    %107 = arith.addf %87, %106 : vector<8x128xf32>
    %c1_52 = arith.constant 1 : index
    %c4_53 = arith.constant 4 : index
    %108 = memref.load %arg4[%c1_52, %c4_53] : memref<2x10xf32, #tpu.memory_space<smem>>
    %109 = vector.broadcast %108 : f32 to vector<8x128xf32>
    %110 = arith.mulf %103, %109 : vector<8x128xf32>
    %111 = arith.addf %91, %110 : vector<8x128xf32>
    %c5 = arith.constant 5 : index
    %c0_54 = arith.constant 0 : index
    %112 = memref.load %arg2[%c5, %c0_54] : memref<10x2xf32, #tpu.memory_space<smem>>
    %113 = vector.broadcast %112 : f32 to vector<8x128xf32>
    %114 = arith.mulf %1, %113 : vector<8x128xf32>
    %c5_55 = arith.constant 5 : index
    %c1_56 = arith.constant 1 : index
    %115 = memref.load %arg2[%c5_55, %c1_56] : memref<10x2xf32, #tpu.memory_space<smem>>
    %116 = vector.broadcast %115 : f32 to vector<8x128xf32>
    %117 = arith.mulf %3, %116 : vector<8x128xf32>
    %118 = arith.addf %114, %117 : vector<8x128xf32>
    %c5_57 = arith.constant 5 : index
    %119 = memref.load %arg3[%c5_57] : memref<10xf32, #tpu.memory_space<smem>>
    %120 = vector.broadcast %119 : f32 to vector<8x128xf32>
    %121 = arith.addf %118, %120 : vector<8x128xf32>
    %cst_58 = arith.constant 0.000000e+00 : f32
    %122 = vector.broadcast %cst_58 : f32 to vector<8x128xf32>
    %123 = arith.maximumf %121, %122 : vector<8x128xf32>
    %c0_59 = arith.constant 0 : index
    %c5_60 = arith.constant 5 : index
    %124 = memref.load %arg4[%c0_59, %c5_60] : memref<2x10xf32, #tpu.memory_space<smem>>
    %125 = vector.broadcast %124 : f32 to vector<8x128xf32>
    %126 = arith.mulf %123, %125 : vector<8x128xf32>
    %127 = arith.addf %107, %126 : vector<8x128xf32>
    %c1_61 = arith.constant 1 : index
    %c5_62 = arith.constant 5 : index
    %128 = memref.load %arg4[%c1_61, %c5_62] : memref<2x10xf32, #tpu.memory_space<smem>>
    %129 = vector.broadcast %128 : f32 to vector<8x128xf32>
    %130 = arith.mulf %123, %129 : vector<8x128xf32>
    %131 = arith.addf %111, %130 : vector<8x128xf32>
    %c6 = arith.constant 6 : index
    %c0_63 = arith.constant 0 : index
    %132 = memref.load %arg2[%c6, %c0_63] : memref<10x2xf32, #tpu.memory_space<smem>>
    %133 = vector.broadcast %132 : f32 to vector<8x128xf32>
    %134 = arith.mulf %1, %133 : vector<8x128xf32>
    %c6_64 = arith.constant 6 : index
    %c1_65 = arith.constant 1 : index
    %135 = memref.load %arg2[%c6_64, %c1_65] : memref<10x2xf32, #tpu.memory_space<smem>>
    %136 = vector.broadcast %135 : f32 to vector<8x128xf32>
    %137 = arith.mulf %3, %136 : vector<8x128xf32>
    %138 = arith.addf %134, %137 : vector<8x128xf32>
    %c6_66 = arith.constant 6 : index
    %139 = memref.load %arg3[%c6_66] : memref<10xf32, #tpu.memory_space<smem>>
    %140 = vector.broadcast %139 : f32 to vector<8x128xf32>
    %141 = arith.addf %138, %140 : vector<8x128xf32>
    %cst_67 = arith.constant 0.000000e+00 : f32
    %142 = vector.broadcast %cst_67 : f32 to vector<8x128xf32>
    %143 = arith.maximumf %141, %142 : vector<8x128xf32>
    %c0_68 = arith.constant 0 : index
    %c6_69 = arith.constant 6 : index
    %144 = memref.load %arg4[%c0_68, %c6_69] : memref<2x10xf32, #tpu.memory_space<smem>>
    %145 = vector.broadcast %144 : f32 to vector<8x128xf32>
    %146 = arith.mulf %143, %145 : vector<8x128xf32>
    %147 = arith.addf %127, %146 : vector<8x128xf32>
    %c1_70 = arith.constant 1 : index
    %c6_71 = arith.constant 6 : index
    %148 = memref.load %arg4[%c1_70, %c6_71] : memref<2x10xf32, #tpu.memory_space<smem>>
    %149 = vector.broadcast %148 : f32 to vector<8x128xf32>
    %150 = arith.mulf %143, %149 : vector<8x128xf32>
    %151 = arith.addf %131, %150 : vector<8x128xf32>
    %c7 = arith.constant 7 : index
    %c0_72 = arith.constant 0 : index
    %152 = memref.load %arg2[%c7, %c0_72] : memref<10x2xf32, #tpu.memory_space<smem>>
    %153 = vector.broadcast %152 : f32 to vector<8x128xf32>
    %154 = arith.mulf %1, %153 : vector<8x128xf32>
    %c7_73 = arith.constant 7 : index
    %c1_74 = arith.constant 1 : index
    %155 = memref.load %arg2[%c7_73, %c1_74] : memref<10x2xf32, #tpu.memory_space<smem>>
    %156 = vector.broadcast %155 : f32 to vector<8x128xf32>
    %157 = arith.mulf %3, %156 : vector<8x128xf32>
    %158 = arith.addf %154, %157 : vector<8x128xf32>
    %c7_75 = arith.constant 7 : index
    %159 = memref.load %arg3[%c7_75] : memref<10xf32, #tpu.memory_space<smem>>
    %160 = vector.broadcast %159 : f32 to vector<8x128xf32>
    %161 = arith.addf %158, %160 : vector<8x128xf32>
    %cst_76 = arith.constant 0.000000e+00 : f32
    %162 = vector.broadcast %cst_76 : f32 to vector<8x128xf32>
    %163 = arith.maximumf %161, %162 : vector<8x128xf32>
    %c0_77 = arith.constant 0 : index
    %c7_78 = arith.constant 7 : index
    %164 = memref.load %arg4[%c0_77, %c7_78] : memref<2x10xf32, #tpu.memory_space<smem>>
    %165 = vector.broadcast %164 : f32 to vector<8x128xf32>
    %166 = arith.mulf %163, %165 : vector<8x128xf32>
    %167 = arith.addf %147, %166 : vector<8x128xf32>
    %c1_79 = arith.constant 1 : index
    %c7_80 = arith.constant 7 : index
    %168 = memref.load %arg4[%c1_79, %c7_80] : memref<2x10xf32, #tpu.memory_space<smem>>
    %169 = vector.broadcast %168 : f32 to vector<8x128xf32>
    %170 = arith.mulf %163, %169 : vector<8x128xf32>
    %171 = arith.addf %151, %170 : vector<8x128xf32>
    %c8 = arith.constant 8 : index
    %c0_81 = arith.constant 0 : index
    %172 = memref.load %arg2[%c8, %c0_81] : memref<10x2xf32, #tpu.memory_space<smem>>
    %173 = vector.broadcast %172 : f32 to vector<8x128xf32>
    %174 = arith.mulf %1, %173 : vector<8x128xf32>
    %c8_82 = arith.constant 8 : index
    %c1_83 = arith.constant 1 : index
    %175 = memref.load %arg2[%c8_82, %c1_83] : memref<10x2xf32, #tpu.memory_space<smem>>
    %176 = vector.broadcast %175 : f32 to vector<8x128xf32>
    %177 = arith.mulf %3, %176 : vector<8x128xf32>
    %178 = arith.addf %174, %177 : vector<8x128xf32>
    %c8_84 = arith.constant 8 : index
    %179 = memref.load %arg3[%c8_84] : memref<10xf32, #tpu.memory_space<smem>>
    %180 = vector.broadcast %179 : f32 to vector<8x128xf32>
    %181 = arith.addf %178, %180 : vector<8x128xf32>
    %cst_85 = arith.constant 0.000000e+00 : f32
    %182 = vector.broadcast %cst_85 : f32 to vector<8x128xf32>
    %183 = arith.maximumf %181, %182 : vector<8x128xf32>
    %c0_86 = arith.constant 0 : index
    %c8_87 = arith.constant 8 : index
    %184 = memref.load %arg4[%c0_86, %c8_87] : memref<2x10xf32, #tpu.memory_space<smem>>
    %185 = vector.broadcast %184 : f32 to vector<8x128xf32>
    %186 = arith.mulf %183, %185 : vector<8x128xf32>
    %187 = arith.addf %167, %186 : vector<8x128xf32>
    %c1_88 = arith.constant 1 : index
    %c8_89 = arith.constant 8 : index
    %188 = memref.load %arg4[%c1_88, %c8_89] : memref<2x10xf32, #tpu.memory_space<smem>>
    %189 = vector.broadcast %188 : f32 to vector<8x128xf32>
    %190 = arith.mulf %183, %189 : vector<8x128xf32>
    %191 = arith.addf %171, %190 : vector<8x128xf32>
    %c9 = arith.constant 9 : index
    %c0_90 = arith.constant 0 : index
    %192 = memref.load %arg2[%c9, %c0_90] : memref<10x2xf32, #tpu.memory_space<smem>>
    %193 = vector.broadcast %192 : f32 to vector<8x128xf32>
    %194 = arith.mulf %1, %193 : vector<8x128xf32>
    %c9_91 = arith.constant 9 : index
    %c1_92 = arith.constant 1 : index
    %195 = memref.load %arg2[%c9_91, %c1_92] : memref<10x2xf32, #tpu.memory_space<smem>>
    %196 = vector.broadcast %195 : f32 to vector<8x128xf32>
    %197 = arith.mulf %3, %196 : vector<8x128xf32>
    %198 = arith.addf %194, %197 : vector<8x128xf32>
    %c9_93 = arith.constant 9 : index
    %199 = memref.load %arg3[%c9_93] : memref<10xf32, #tpu.memory_space<smem>>
    %200 = vector.broadcast %199 : f32 to vector<8x128xf32>
    %201 = arith.addf %198, %200 : vector<8x128xf32>
    %cst_94 = arith.constant 0.000000e+00 : f32
    %202 = vector.broadcast %cst_94 : f32 to vector<8x128xf32>
    %203 = arith.maximumf %201, %202 : vector<8x128xf32>
    %c0_95 = arith.constant 0 : index
    %c9_96 = arith.constant 9 : index
    %204 = memref.load %arg4[%c0_95, %c9_96] : memref<2x10xf32, #tpu.memory_space<smem>>
    %205 = vector.broadcast %204 : f32 to vector<8x128xf32>
    %206 = arith.mulf %203, %205 : vector<8x128xf32>
    %207 = arith.addf %187, %206 : vector<8x128xf32>
    %c1_97 = arith.constant 1 : index
    %c9_98 = arith.constant 9 : index
    %208 = memref.load %arg4[%c1_97, %c9_98] : memref<2x10xf32, #tpu.memory_space<smem>>
    %209 = vector.broadcast %208 : f32 to vector<8x128xf32>
    %210 = arith.mulf %203, %209 : vector<8x128xf32>
    %211 = arith.addf %191, %210 : vector<8x128xf32>
    %c0_99 = arith.constant 0 : index
    %c0_100 = arith.constant 0 : index
    %c0_101 = arith.constant 0 : index
    %212 = vector.load %arg6[%c0_99, %c0_100, %c0_101] : memref<2x8x128xf32, #tpu.memory_space<vmem>>, vector<1x8x128xf32>
    %213 = vector.shape_cast %212 : vector<1x8x128xf32> to vector<8x128xf32>
    %214 = vector.shape_cast %207 : vector<8x128xf32> to vector<1x8x128xf32>
    tpu.vector_store %arg6[%c0_99, %c0_100, %c0_101], %214 {strides = array<i32>} : memref<2x8x128xf32, #tpu.memory_space<vmem>>, vector<1x8x128xf32>,
    %c1_102 = arith.constant 1 : index
    %c0_103 = arith.constant 0 : index
    %c0_104 = arith.constant 0 : index
    %215 = vector.load %arg6[%c1_102, %c0_103, %c0_104] : memref<2x8x128xf32, #tpu.memory_space<vmem>>, vector<1x8x128xf32>
    %216 = vector.shape_cast %215 : vector<1x8x128xf32> to vector<8x128xf32>
    %217 = vector.shape_cast %211 : vector<8x128xf32> to vector<1x8x128xf32>
    tpu.vector_store %arg6[%c1_102, %c0_103, %c0_104], %217 {strides = array<i32>} : memref<2x8x128xf32, #tpu.memory_space<vmem>>, vector<1x8x128xf32>,
    return
  }
  func.func @transform_0(%arg0: i32) -> (i32, i32, i32) {
    %c0_i32 = arith.constant 0 : i32
    %c0_i32_0 = arith.constant 0 : i32
    %c0_i32_1 = arith.constant 0 : i32
    return %c0_i32, %arg0, %c0_i32_0 : i32, i32, i32
  }
  func.func @transform_1(%arg0: i32) -> (i32, i32) {
    %c0_i32 = arith.constant 0 : i32
    %c0_i32_0 = arith.constant 0 : i32
    %c0_i32_1 = arith.constant 0 : i32
    return %c0_i32, %c0_i32_0 : i32, i32
  }
  func.func @transform_2(%arg0: i32) -> i32 {
    %c0_i32 = arith.constant 0 : i32
    %c0_i32_0 = arith.constant 0 : i32
    return %c0_i32 : i32
  }
  func.func @transform_3(%arg0: i32) -> (i32, i32) {
    %c0_i32 = arith.constant 0 : i32
    %c0_i32_0 = arith.constant 0 : i32
    %c0_i32_1 = arith.constant 0 : i32
    return %c0_i32, %c0_i32_0 : i32, i32
  }
  func.func @transform_4(%arg0: i32) -> i32 {
    %c0_i32 = arith.constant 0 : i32
    %c0_i32_0 = arith.constant 0 : i32
    return %c0_i32 : i32
  }
  func.func @transform_5(%arg0: i32) -> (i32, i32, i32) {
    %c0_i32 = arith.constant 0 : i32
    %c0_i32_0 = arith.constant 0 : i32
    %c0_i32_1 = arith.constant 0 : i32
    return %c0_i32, %arg0, %c0_i32_0 : i32, i32, i32
  }
}

</mosaic_0001>

<llo_original>
// kernel: tpu_custom_call.1
$region0: #{tpu_custom_call.1}
  #allocation0 [shape = 'u32[]', space=smem, size = 0x4, offset = 0x4, fixed_abs, tag = 'smem constant byte address 0x4 - core index']
  #allocation1 [shape = 'u32[144,128]{1,0:T(1,128)}', space=vmem, size = 0x12000, scoped, tag = 'internal scratch']
  %s0 = inlined_call_operand.vmem [shape: f32[2,8,128], index: 0, kind: input, shape index: {}]
  %s1 = inlined_call_operand.vmem [shape: f32[10,2], index: 1, kind: input, shape index: {}]
  %s2 = inlined_call_operand.vmem [shape: f32[10], index: 2, kind: input, shape index: {}]
  %s3 = inlined_call_operand.vmem [shape: f32[2,10], index: 3, kind: input, shape index: {}]
  %s4 = inlined_call_operand.vmem [shape: f32[2], index: 4, kind: input, shape index: {}]
  %s5 = inlined_call_operand.hbm [shape: f32[2,8,128], index: 5, kind: output, shape index: {}]
  %s6 = sld [smem:[#allocation0]]
  $region46: #{tpu_custom_call.1} parent=0
    _
  %s8 = ssub.s32 1, %s6
  %s9 = scalar_select 0, %s8, %s6
  $region1: #{tpu_custom_call.1} parent=0
    #allocation2 [shape = 'u8[8192]{0}', space=smem, size = 0x2000, scoped, tag = 'input window, operand 1, single buffered']
    #allocation3 [shape = 's32[1]{0}', space=sflag, size = 0x4, scoped, tag = 'scoped memory for tpu_custom_call.1']
    #allocation4 [shape = 's32[1]{0}', space=sflag, size = 0x4, scoped, tag = 'scoped memory for tpu_custom_call.1']
    #allocation5 [shape = 'u8[512]{0}', space=smem, size = 0x200, scoped, tag = 'input window, operand 2, single buffered']
    #allocation6 [shape = 's32[1]{0}', space=sflag, size = 0x4, scoped, tag = 'scoped memory for tpu_custom_call.1']
    #allocation7 [shape = 'u8[1024]{0}', space=smem, size = 0x400, scoped, tag = 'input window, operand 3, single buffered']
    #allocation8 [shape = 'u8[512]{0}', space=smem, size = 0x200, scoped, tag = 'input window, operand 4, single buffered']
    #allocation9 [shape = 's32[1]{0}', space=sflag, size = 0x4, scoped, tag = 'scoped memory for tpu_custom_call.1']
    #allocation10 [shape = 'u8[8192]{0}', space=vmem, size = 0x2000, scoped, tag = 'output window, operand 0, single buffered']
    %10 = vsyncpa [#allocation4], 0
    %11 = vsyncpa [#allocation6], 0
    %12 = vsyncpa [#allocation9], 0
    %13 = vsyncpa [#allocation3], 0
    // Predicated region
    $region2: #{tpu_custom_call.1} parent=1 // pred_check
      _
    $region3: #{tpu_custom_call.1} parent=1 // pred_check_branch
      %15 = sbr.rel (0) target = $region5
    $region4: #{tpu_custom_call.1} parent=1 // pred_region
      _
    $region5: #{tpu_custom_call.1} parent=1 // pred_fallthru
      _
    // Predicated region
    $region6: #{tpu_custom_call.1} parent=1 // pred_check
      _
    $region7: #{tpu_custom_call.1} parent=1 // pred_check_branch
      %17 = sbr.rel (0) target = $region9
    $region8: #{tpu_custom_call.1} parent=1 // pred_region
      %s19 = ssub.s32 256, 256
      %20 = vsyncadd [#allocation4], %s19
      %s21 = sshll.u32 %s1, 4
      %s22 = int_to_ptr.vmem [resolvable:$true] %s21
      %27 = dma.vmem_to_smem %s22, 256, [#allocation2], [#allocation4], 128, 128, 8
    $region9: #{tpu_custom_call.1} parent=1 // pred_fallthru
      _
    // Predicated region
    $region10: #{tpu_custom_call.1} parent=1 // pred_check
      _
    $region11: #{tpu_custom_call.1} parent=1 // pred_check_branch
      %29 = sbr.rel (0) target = $region13
    $region12: #{tpu_custom_call.1} parent=1 // pred_region
      %s31 = ssub.s32 16, 16
      %32 = vsyncadd [#allocation6], %s31
      %s34 = sshll.u32 %s2, 4
      %s35 = int_to_ptr.vmem [resolvable:$true] %s34
      %37 = dma.vmem_to_smem %s35, 16, [#allocation5], [#allocation6]
    $region13: #{tpu_custom_call.1} parent=1 // pred_fallthru
      _
    // Predicated region
    $region14: #{tpu_custom_call.1} parent=1 // pred_check
      _
    $region15: #{tpu_custom_call.1} parent=1 // pred_check_branch
      %39 = sbr.rel (0) target = $region17
    $region16: #{tpu_custom_call.1} parent=1 // pred_region
      %s41 = ssub.s32 32, 32
      %42 = vsyncadd [#allocation6], %s41
      %s44 = sshll.u32 %s3, 4
      %s45 = int_to_ptr.vmem [resolvable:$true] %s44
      %47 = dma.vmem_to_smem %s45, 32, [#allocation7], [#allocation6]
    $region17: #{tpu_custom_call.1} parent=1 // pred_fallthru
      _
    // Predicated region
    $region18: #{tpu_custom_call.1} parent=1 // pred_check
      _
    $region19: #{tpu_custom_call.1} parent=1 // pred_check_branch
      %49 = sbr.rel (0) target = $region21
    $region20: #{tpu_custom_call.1} parent=1 // pred_region
      %s51 = ssub.s32 16, 16
      %52 = vsyncadd [#allocation9], %s51
      %s54 = sshll.u32 %s4, 4
      %s55 = int_to_ptr.vmem [resolvable:$true] %s54
      %57 = dma.vmem_to_smem %s55, 16, [#allocation8], [#allocation9]
    $region21: #{tpu_custom_call.1} parent=1 // pred_fallthru
      _
    // Predicated region
    $region22: #{tpu_custom_call.1} parent=1 // pred_check
      _
    $region23: #{tpu_custom_call.1} parent=1 // pred_check_branch
      %59 = sbr.rel (0) target = $region25
    $region24: #{tpu_custom_call.1} parent=1 // pred_region
      %60 = dma.done [#allocation4], 256
    $region25: #{tpu_custom_call.1} parent=1 // pred_fallthru
      _
    // Predicated region
    $region26: #{tpu_custom_call.1} parent=1 // pred_check
      _
    $region27: #{tpu_custom_call.1} parent=1 // pred_check_branch
      %62 = sbr.rel (0) target = $region29
    $region28: #{tpu_custom_call.1} parent=1 // pred_region
      %63 = dma.done [#allocation6], 16
    $region29: #{tpu_custom_call.1} parent=1 // pred_fallthru
      _
    // Predicated region
    $region30: #{tpu_custom_call.1} parent=1 // pred_check
      _
    $region31: #{tpu_custom_call.1} parent=1 // pred_check_branch
      %65 = sbr.rel (0) target = $region33
    $region32: #{tpu_custom_call.1} parent=1 // pred_region
      %66 = dma.done [#allocation6], 32
    $region33: #{tpu_custom_call.1} parent=1 // pred_fallthru
      _
    // Predicated region
    $region34: #{tpu_custom_call.1} parent=1 // pred_check
      _
    $region35: #{tpu_custom_call.1} parent=1 // pred_check_branch
      %68 = sbr.rel (0) target = $region37
    $region36: #{tpu_custom_call.1} parent=1 // pred_region
      %69 = dma.done [#allocation9], 16
    $region37: #{tpu_custom_call.1} parent=1 // pred_fallthru
      _
    %70 = sfence
    %v71 = vld [vmem:[%s0] sm:$0xff]
    %s72 = scalar_lea.vmem %s0, 8
    %v73 = vld [vmem:[%s72] sm:$0xff]
    %s74 = sld [smem:[#allocation8]]
    %v75 = vstv %s74
    %v76 = vadd.f32 %v75, 0.0
    %s77 = sld [smem:[#allocation8 + $0x1]]
    %v78 = vstv %s77
    %v79 = vadd.f32 %v78, 0.0
    %s80 = sld [smem:[#allocation2]]
    %v81 = vstv %s80
    %v82 = vmul.f32 %v71, %v81
    %s83 = sld [smem:[#allocation2 + $0x1]]
    %v84 = vstv %s83
    %v85 = vmul.f32 %v73, %v84
    %v86 = vadd.f32 %v82, %v85
    %s87 = sld [smem:[#allocation5]]
    %v88 = vstv %s87
    %v89 = vadd.f32 %v86, %v88
    %v90 = vmax.f32 %v89, 0.0
    %s91 = sld [smem:[#allocation7]]
    %v92 = vstv %s91
    %v93 = vmul.f32 %v90, %v92
    %v94 = vadd.f32 %v76, %v93
    %s95 = sld [smem:[#allocation7 + $0x80]]
    %v96 = vstv %s95
    %v97 = vmul.f32 %v90, %v96
    %v98 = vadd.f32 %v79, %v97
    %s99 = sld [smem:[#allocation2 + $0x80]]
    %v100 = vstv %s99
    %v101 = vmul.f32 %v71, %v100
    %s102 = sld [smem:[#allocation2 + $0x81]]
    %v103 = vstv %s102
    %v104 = vmul.f32 %v73, %v103
    %v105 = vadd.f32 %v101, %v104
    %s106 = sld [smem:[#allocation5 + $0x1]]
    %v107 = vstv %s106
    %v108 = vadd.f32 %v105, %v107
    %v109 = vmax.f32 %v108, 0.0
    %s110 = sld [smem:[#allocation7 + $0x1]]
    %v111 = vstv %s110
    %v112 = vmul.f32 %v109, %v111
    %v113 = vadd.f32 %v94, %v112
    %s114 = sld [smem:[#allocation7 + $0x81]]
    %v115 = vstv %s114
    %v116 = vmul.f32 %v109, %v115
    %v117 = vadd.f32 %v98, %v116
    %s118 = sld [smem:[#allocation2 + $0x100]]
    %v119 = vstv %s118
    %v120 = vmul.f32 %v71, %v119
    %s121 = sld [smem:[#allocation2 + $0x101]]
    %v122 = vstv %s121
    %v123 = vmul.f32 %v73, %v122
    %v124 = vadd.f32 %v120, %v123
    %s125 = sld [smem:[#allocation5 + $0x2]]
    %v126 = vstv %s125
    %v127 = vadd.f32 %v124, %v126
    %v128 = vmax.f32 %v127, 0.0
    %s129 = sld [smem:[#allocation7 + $0x2]]
    %v130 = vstv %s129
    %v131 = vmul.f32 %v128, %v130
    %v132 = vadd.f32 %v113, %v131
    %s133 = sld [smem:[#allocation7 + $0x82]]
    %v134 = vstv %s133
    %v135 = vmul.f32 %v128, %v134
    %v136 = vadd.f32 %v117, %v135
    %s137 = sld [smem:[#allocation2 + $0x180]]
    %v138 = vstv %s137
    %v139 = vmul.f32 %v71, %v138
    %s140 = sld [smem:[#allocation2 + $0x181]]
    %v141 = vstv %s140
    %v142 = vmul.f32 %v73, %v141
    %v143 = vadd.f32 %v139, %v142
    %s144 = sld [smem:[#allocation5 + $0x3]]
    %v145 = vstv %s144
    %v146 = vadd.f32 %v143, %v145
    %v147 = vmax.f32 %v146, 0.0
    %s148 = sld [smem:[#allocation7 + $0x3]]
    %v149 = vstv %s148
    %v150 = vmul.f32 %v147, %v149
    %v151 = vadd.f32 %v132, %v150
    %s152 = sld [smem:[#allocation7 + $0x83]]
    %v153 = vstv %s152
    %v154 = vmul.f32 %v147, %v153
    %v155 = vadd.f32 %v136, %v154
    %s156 = sld [smem:[#allocation2 + $0x200]]
    %v157 = vstv %s156
    %v158 = vmul.f32 %v71, %v157
    %s159 = sld [smem:[#allocation2 + $0x201]]
    %v160 = vstv %s159
    %v161 = vmul.f32 %v73, %v160
    %v162 = vadd.f32 %v158, %v161
    %s163 = sld [smem:[#allocation5 + $0x4]]
    %v164 = vstv %s163
    %v165 = vadd.f32 %v162, %v164
    %v166 = vmax.f32 %v165, 0.0
    %s167 = sld [smem:[#allocation7 + $0x4]]
    %v168 = vstv %s167
    %v169 = vmul.f32 %v166, %v168
    %v170 = vadd.f32 %v151, %v169
    %s171 = sld [smem:[#allocation7 + $0x84]]
    %v172 = vstv %s171
    %v173 = vmul.f32 %v166, %v172
    %v174 = vadd.f32 %v155, %v173
    %s175 = sld [smem:[#allocation2 + $0x280]]
    %v176 = vstv %s175
    %v177 = vmul.f32 %v71, %v176
    %s178 = sld [smem:[#allocation2 + $0x281]]
    %v179 = vstv %s178
    %v180 = vmul.f32 %v73, %v179
    %v181 = vadd.f32 %v177, %v180
    %s182 = sld [smem:[#allocation5 + $0x5]]
    %v183 = vstv %s182
    %v184 = vadd.f32 %v181, %v183
    %v185 = vmax.f32 %v184, 0.0
    %s186 = sld [smem:[#allocation7 + $0x5]]
    %v187 = vstv %s186
    %v188 = vmul.f32 %v185, %v187
    %v189 = vadd.f32 %v170, %v188
    %s190 = sld [smem:[#allocation7 + $0x85]]
    %v191 = vstv %s190
    %v192 = vmul.f32 %v185, %v191
    %v193 = vadd.f32 %v174, %v192
    %s194 = sld [smem:[#allocation2 + $0x300]]
    %v195 = vstv %s194
    %v196 = vmul.f32 %v71, %v195
    %s197 = sld [smem:[#allocation2 + $0x301]]
    %v198 = vstv %s197
    %v199 = vmul.f32 %v73, %v198
    %v200 = vadd.f32 %v196, %v199
    %s201 = sld [smem:[#allocation5 + $0x6]]
    %v202 = vstv %s201
    %v203 = vadd.f32 %v200, %v202
    %v204 = vmax.f32 %v203, 0.0
    %s205 = sld [smem:[#allocation7 + $0x6]]
    %v206 = vstv %s205
    %v207 = vmul.f32 %v204, %v206
    %v208 = vadd.f32 %v189, %v207
    %s209 = sld [smem:[#allocation7 + $0x86]]
    %v210 = vstv %s209
    %v211 = vmul.f32 %v204, %v210
    %v212 = vadd.f32 %v193, %v211
    %s213 = sld [smem:[#allocation2 + $0x380]]
    %v214 = vstv %s213
    %v215 = vmul.f32 %v71, %v214
    %s216 = sld [smem:[#allocation2 + $0x381]]
    %v217 = vstv %s216
    %v218 = vmul.f32 %v73, %v217
    %v219 = vadd.f32 %v215, %v218
    %s220 = sld [smem:[#allocation5 + $0x7]]
    %v221 = vstv %s220
    %v222 = vadd.f32 %v219, %v221
    %v223 = vmax.f32 %v222, 0.0
    %s224 = sld [smem:[#allocation7 + $0x7]]
    %v225 = vstv %s224
    %v226 = vmul.f32 %v223, %v225
    %v227 = vadd.f32 %v208, %v226
    %s228 = sld [smem:[#allocation7 + $0x87]]
    %v229 = vstv %s228
    %v230 = vmul.f32 %v223, %v229
    %v231 = vadd.f32 %v212, %v230
    %s232 = sld [smem:[#allocation2 + $0x400]]
    %v233 = vstv %s232
    %v234 = vmul.f32 %v71, %v233
    %s235 = sld [smem:[#allocation2 + $0x401]]
    %v236 = vstv %s235
    %v237 = vmul.f32 %v73, %v236
    %v238 = vadd.f32 %v234, %v237
    %s239 = sld [smem:[#allocation5 + $0x8]]
    %v240 = vstv %s239
    %v241 = vadd.f32 %v238, %v240
    %v242 = vmax.f32 %v241, 0.0
    %s243 = sld [smem:[#allocation7 + $0x8]]
    %v244 = vstv %s243
    %v245 = vmul.f32 %v242, %v244
    %v246 = vadd.f32 %v227, %v245
    %s247 = sld [smem:[#allocation7 + $0x88]]
    %v248 = vstv %s247
    %v249 = vmul.f32 %v242, %v248
    %v250 = vadd.f32 %v231, %v249
    %s251 = sld [smem:[#allocation2 + $0x480]]
    %v252 = vstv %s251
    %v253 = vmul.f32 %v71, %v252
    %s254 = sld [smem:[#allocation2 + $0x481]]
    %v255 = vstv %s254
    %v256 = vmul.f32 %v73, %v255
    %v257 = vadd.f32 %v253, %v256
    %s258 = sld [smem:[#allocation5 + $0x9]]
    %v259 = vstv %s258
    %v260 = vadd.f32 %v257, %v259
    %v261 = vmax.f32 %v260, 0.0
    %s262 = sld [smem:[#allocation7 + $0x9]]
    %v263 = vstv %s262
    %v264 = vmul.f32 %v261, %v263
    %v265 = vadd.f32 %v246, %v264
    %s266 = sld [smem:[#allocation7 + $0x89]]
    %v267 = vstv %s266
    %v268 = vmul.f32 %v261, %v267
    %v269 = vadd.f32 %v250, %v268
    %270 = vst [vmem:[#allocation10] sm:$0xff] %v265
    %s271 = scalar_lea.vmem [#allocation10], 8
    %272 = vst [vmem:[%s271] sm:$0xff] %v269
    // Predicated region
    $region38: #{tpu_custom_call.1} parent=1 // pred_check
      _
    $region39: #{tpu_custom_call.1} parent=1 // pred_check_branch
      %274 = sbr.rel (0) target = $region41
    $region40: #{tpu_custom_call.1} parent=1 // pred_region
      %s276 = ssub.s32 256, 256
      %277 = vsyncadd [#allocation3], %s276
      %s278 = sshll.u32 [#allocation10], 4
      %s279 = int_to_ptr.vmem [resolvable:$true] %s278
      %284 = dma.vmem_to_hbm [thread:$0]  %s279, 256, %s5, [#allocation3], 128, 128, 8
    $region41: #{tpu_custom_call.1} parent=1 // pred_fallthru
      _
    // Predicated region
    $region42: #{tpu_custom_call.1} parent=1 // pred_check
      _
    $region43: #{tpu_custom_call.1} parent=1 // pred_check_branch
      %286 = sbr.rel (0) target = $region45
    $region44: #{tpu_custom_call.1} parent=1 // pred_region
      %287 = dma.done [#allocation3], 256
    $region45: #{tpu_custom_call.1} parent=1 // pred_fallthru
      _
    %288 = vsyncpa [#allocation3], 1
    %289 = vsyncpa [#allocation4], 1
    %290 = vsyncpa [#allocation6], 1
    %291 = vsyncpa [#allocation9], 1

</llo_original>
